<compile_context>
chip_gen: v7x
topology: tpu7x:2x2x1
jax: 0.10.0
libtpu: 0.0.40
codegen_flags: <defaults>
</compile_context>

<pallas_src>
import jax
import jax.numpy as jnp
from jax.experimental import pallas as pl
from jax.experimental.pallas import tpu as pltpu

BN_EPS = 1e-5
LANE = 128
SUBLANE = 8
TILE_K_MAX = 2048                      # K tile (multiple of 128) when 16*Cin is large
VMEM_TILE_BUDGET = 40 * 1024 * 1024    # working-set budget used for tile sizing
VMEM_LIMIT_CAP = 56 * 1024 * 1024      # stay below v7x's 64 MiB physical VMEM


def _round_up(x, m):
    return (x + m - 1) // m * m


def _vmem_estimate(tile_m, tile_k, c_pad):
    """Rough per-step VMEM working set (double-buffered pipeline + scratch)."""
    patches = 2 * tile_m * tile_k * 2        # bf16 input tile, 2 buffers
    weights = 2 * tile_k * c_pad * 2         # bf16 weight tile, 2 buffers
    conv_out = 2 * tile_m * c_pad * 2        # bf16 conv tile, 2 buffers
    stats = 2 * 2 * SUBLANE * c_pad * 4      # two f32 partial-stat blocks
    acc = tile_m * c_pad * 4                 # f32 accumulator scratch
    return patches + weights + conv_out + stats + acc


def _pick_tiles(m, k_pad, c_pad):
    tile_k = min(k_pad, TILE_K_MAX)
    tile_m = 16
    for cand in (1024, 512, 256, 128, 64, 32, 16):
        if _vmem_estimate(cand, tile_k, c_pad) <= VMEM_TILE_BUDGET:
            tile_m = cand
            break
    # bf16 native tile is (16, 128): keep the sublane extent a multiple of 16.
    tile_m = min(tile_m, _round_up(m, 16))
    return tile_m, tile_k


def conv_stats_kernel(p_ref, w_ref, conv_ref, psum_ref, pssq_ref, acc_ref):
    """Pass 1: conv as K-tiled bf16 matmul (f32 accumulation) per M tile plus
    per-tile partial channel sum / sum-of-squares (written at the last K step)."""
    kk = pl.program_id(1)

    @pl.when(kk == 0)
    def _():
        acc_ref[...] = jnp.zeros_like(acc_ref)

    acc_ref[...] += jnp.dot(p_ref[...], w_ref[...],
                            preferred_element_type=jnp.float32)

    @pl.when(kk == pl.num_programs(1) - 1)
    def _():
        acc = acc_ref[...]
        conv_ref[...] = acc.astype(conv_ref.dtype)
        s = jnp.sum(acc, axis=0, keepdims=True)            # (1, c_pad)
        q = jnp.sum(acc * acc, axis=0, keepdims=True)      # (1, c_pad)
        # Partial-stat block is (SUBLANE, c_pad); replicate across sublanes and
        # divide by SUBLANE in the glue reduction.
        psum_ref[...] = jnp.broadcast_to(s, psum_ref.shape)
        pssq_ref[...] = jnp.broadcast_to(q, pssq_ref.shape)


def bn_relu_kernel(conv_ref, scale_ref, shift_ref, o_ref):
    """Pass 2: fused BatchNorm (precomputed scale/shift) + ReLU over an M tile."""
    x = conv_ref[...].astype(jnp.float32)
    o_ref[...] = jnp.maximum(x * scale_ref[...] + shift_ref[...],
                             0.0).astype(o_ref.dtype)


def block_forward_nhwc(x_nhwc, weight_oihw, gamma, beta):
    """Core Block forward on NHWC input; returns NHWC bf16."""
    n, h, w_sp, cin = x_nhwc.shape
    cout = weight_oihw.shape[0]
    ho, wo = h // 2, w_sp // 2
    m = n * ho * wo
    k = 16 * cin

    # ---- glue: reflect pad + im2col built directly in bf16 --------------------
    x = x_nhwc.astype(jnp.bfloat16)
    xp = jnp.pad(x, ((0, 0), (1, 1), (1, 1), (0, 0)), mode="reflect")
    taps = [xp[:, kh:kh + 2 * ho:2, kw:kw + 2 * wo:2, :]
            for kh in range(4) for kw in range(4)]               # 16 x (N,Ho,Wo,Cin)
    patches = jnp.stack(taps, axis=3).reshape(m, k)              # (M, 16*Cin) bf16

    # weights: OIHW -> (KH,KW,Cin,Cout) -> (16*Cin, Cout), same tap ordering
    w_flat = jnp.transpose(weight_oihw, (2, 3, 1, 0)).reshape(k, cout)
    w_flat = w_flat.astype(jnp.bfloat16)

    # ---- padding to MXU/lane-friendly shapes, tile selection -------------------
    c_pad = _round_up(cout, LANE)                 # lane-dense unmasked stores
    k_pad = _round_up(k, LANE)
    tile_m, tile_k = _pick_tiles(m, k_pad, c_pad)
    k_pad = _round_up(k_pad, tile_k)
    m_pad = _round_up(m, tile_m)
    num_tiles = m_pad // tile_m
    num_k = k_pad // tile_k

    # zero padding contributes nothing to the conv or the BN partial sums
    patches = jnp.pad(patches, ((0, m_pad - m), (0, k_pad - k)))
    w_flat = jnp.pad(w_flat, ((0, k_pad - k), (0, c_pad - cout)))

    est = _vmem_estimate(tile_m, tile_k, c_pad)
    vmem_limit = min(VMEM_LIMIT_CAP, max(32 * 1024 * 1024, est + 8 * 1024 * 1024))

    # ---- pass 1: conv matmul (K-tiled) + per-tile partial stats ----------------
    conv_out, psum, pssq = pl.pallas_call(
        conv_stats_kernel,
        grid=(num_tiles, num_k),
        in_specs=[
            pl.BlockSpec((tile_m, tile_k), lambda i, kk: (i, kk)),
            pl.BlockSpec((tile_k, c_pad), lambda i, kk: (kk, 0)),
        ],
        out_specs=[
            pl.BlockSpec((tile_m, c_pad), lambda i, kk: (i, 0)),
            pl.BlockSpec((SUBLANE, c_pad), lambda i, kk: (i, 0)),
            pl.BlockSpec((SUBLANE, c_pad), lambda i, kk: (i, 0)),
        ],
        out_shape=[
            jax.ShapeDtypeStruct((m_pad, c_pad), jnp.bfloat16),
            jax.ShapeDtypeStruct((num_tiles * SUBLANE, c_pad), jnp.float32),
            jax.ShapeDtypeStruct((num_tiles * SUBLANE, c_pad), jnp.float32),
        ],
        scratch_shapes=[pltpu.VMEM((tile_m, c_pad), jnp.float32)],
        compiler_params=pltpu.CompilerParams(
            dimension_semantics=("parallel", "arbitrary"),
            vmem_limit_bytes=vmem_limit),
    )(patches, w_flat)

    # ---- glue: reduce partial stats, precompute fused BN scale/shift (tiny) ----
    inv_m = 1.0 / m
    ch_sum = jnp.sum(psum, axis=0) * (1.0 / SUBLANE)       # (c_pad,)
    ch_ssq = jnp.sum(pssq, axis=0) * (1.0 / SUBLANE)
    mean = ch_sum * inv_m
    var = jnp.maximum(ch_ssq * inv_m - mean * mean, 0.0)
    g = jnp.pad(gamma.astype(jnp.float32), (0, c_pad - cout))
    b = jnp.pad(beta.astype(jnp.float32), (0, c_pad - cout))
    scale = g * jax.lax.rsqrt(var + BN_EPS)
    shift = (b - mean * scale).reshape(1, c_pad)
    scale = scale.reshape(1, c_pad)

    # ---- pass 2: fused scale/shift + ReLU, in place over the conv buffer -------
    out_flat = pl.pallas_call(
        bn_relu_kernel,
        grid=(num_tiles,),
        in_specs=[
            pl.BlockSpec((tile_m, c_pad), lambda i: (i, 0)),
            pl.BlockSpec((1, c_pad), lambda i: (0, 0)),
            pl.BlockSpec((1, c_pad), lambda i: (0, 0)),
        ],
        out_specs=pl.BlockSpec((tile_m, c_pad), lambda i: (i, 0)),
        out_shape=jax.ShapeDtypeStruct((m_pad, c_pad), jnp.bfloat16),
        input_output_aliases={0: 0},
        compiler_params=pltpu.CompilerParams(
            dimension_semantics=("parallel",),
            vmem_limit_bytes=vmem_limit),
    )(conv_out, scale, shift)

    return out_flat[:m, :cout].reshape(n, ho, wo, cout)


@jax.jit
def block_forward(x_nchw, weight_oihw, gamma, beta):
    """Matches Block(in_c, out_c, down=True, act='relu', use_dropout=False).forward
    with PyTorch's NCHW f32 interface (layout conversions hoisted here so a
    chain of Blocks can call block_forward_nhwc directly)."""
    x = jnp.transpose(x_nchw, (0, 2, 3, 1))
    y = block_forward_nhwc(x, weight_oihw, gamma, beta)
    return jnp.transpose(y, (0, 3, 1, 2)).astype(jnp.float32)


def _reference(x_nchw, weight_oihw, gamma, beta):
    """Pure-JAX (f32) reference of the same forward."""
    xp = jnp.pad(x_nchw, ((0, 0), (0, 0), (1, 1), (1, 1)), mode="reflect")
    conv = jax.lax.conv_general_dilated(
        xp, weight_oihw, window_strides=(2, 2), padding=[(0, 0), (0, 0)],
        dimension_numbers=("NCHW", "OIHW", "NCHW"))
    mean = jnp.mean(conv, axis=(0, 2, 3), keepdims=True)
    var = jnp.mean((conv - mean) ** 2, axis=(0, 2, 3), keepdims=True)
    y = (conv - mean) * jax.lax.rsqrt(var + BN_EPS)
    y = y * gamma.reshape(1, -1, 1, 1) + beta.reshape(1, -1, 1, 1)
    return jnp.maximum(y, 0.0)


if __name__ == "__main__":
    # Small shapes consistent with the module: batch=2, in_channels=4,
    # out_channels=8, spatial 16x16 -> output (2, 8, 8, 8) in NCHW.
    N, CIN, COUT, H, W = 2, 4, 8, 16, 16

    key = jax.random.PRNGKey(0)
    kx, kw = jax.random.split(key)
    x = jax.random.normal(kx, (N, CIN, H, W), dtype=jnp.float32)
    weight = jax.random.normal(kw, (COUT, CIN, 4, 4), dtype=jnp.float32) * 0.05
    gamma = jnp.ones((COUT,), jnp.float32)   # nn.BatchNorm2d default weight
    beta = jnp.zeros((COUT,), jnp.float32)   # nn.BatchNorm2d default bias

    out = jax.block_until_ready(block_forward(x, weight, gamma, beta))
    assert out.shape == (N, COUT, H // 2, W // 2), out.shape

    ref = jax.block_until_ready(_reference(x, weight, gamma, beta))
    max_err = float(jnp.max(jnp.abs(out - ref)))
    mean_err = float(jnp.mean(jnp.abs(out - ref)))
    # bf16 matmul inputs + bf16 conv/output intermediates (f32 accumulation) ->
    # tolerance loosened vs the pure-f32 reference.
    assert max_err < 1e-1 and mean_err < 2e-2, (max_err, mean_err)

    print("KERNEL_OK")
</pallas_src>

<mosaic_0001>
module attributes {stable_mosaic.version = 11 : i64} {
  func.func @conv_stats_kernel(%arg0: i32, %arg1: i32, %arg2: memref<128x128xbf16, #tpu.memory_space<vmem>>, %arg3: memref<128x128xbf16, #tpu.memory_space<vmem>>, %arg4: memref<128x128xbf16, #tpu.memory_space<vmem>>, %arg5: memref<8x128xf32, #tpu.memory_space<vmem>>, %arg6: memref<8x128xf32, #tpu.memory_space<vmem>>, %arg7: memref<128x128xf32, #tpu.memory_space<vmem>>) attributes {dimension_semantics = [#tpu.dimension_semantics<parallel>, #tpu.dimension_semantics<arbitrary>], iteration_bounds = array<i64: 1, 1>, scalar_prefetch = 0 : i64, scratch_operands = 1 : i64, tpu.core_type = #tpu.core_type<tc>, window_params = [{transform_indices = @transform_0, window_bounds = array<i64: 128, 128>}, {transform_indices = @transform_1, window_bounds = array<i64: 128, 128>}, {transform_indices = @transform_2, window_bounds = array<i64: 128, 128>}, {transform_indices = @transform_3, window_bounds = array<i64: 8, 128>}, {transform_indices = @transform_4, window_bounds = array<i64: 8, 128>}]} {
    %c0_i32 = arith.constant 0 : i32
    %0 = arith.cmpi eq, %arg1, %c0_i32 : i32
    %1 = arith.extui %0 : i1 to i32
    %c0_i32_0 = arith.constant 0 : i32
    %2 = arith.cmpi ne, %1, %c0_i32_0 : i32
    scf.if %2 {
      %cst_10 = arith.constant 0.000000e+00 : f32
      %12 = vector.broadcast %cst_10 : f32 to vector<128x128xf32>
      %c0_11 = arith.constant 0 : index
      %c0_12 = arith.constant 0 : index
      %13 = vector.load %arg7[%c0_11, %c0_12] : memref<128x128xf32, #tpu.memory_space<vmem>>, vector<128x128xf32>
      tpu.vector_store %arg7[%c0_11, %c0_12], %12 {strides = array<i32>} : memref<128x128xf32, #tpu.memory_space<vmem>>, vector<128x128xf32>,
    } else {
    }
    %c0 = arith.constant 0 : index
    %c0_1 = arith.constant 0 : index
    %3 = vector.load %arg7[%c0, %c0_1] : memref<128x128xf32, #tpu.memory_space<vmem>>, vector<128x128xf32>
    %c0_2 = arith.constant 0 : index
    %c0_3 = arith.constant 0 : index
    %4 = vector.load %arg2[%c0_2, %c0_3] : memref<128x128xbf16, #tpu.memory_space<vmem>>, vector<128x128xbf16>
    %c0_4 = arith.constant 0 : index
    %c0_5 = arith.constant 0 : index
    %5 = vector.load %arg3[%c0_4, %c0_5] : memref<128x128xbf16, #tpu.memory_space<vmem>>, vector<128x128xbf16>
    %cst = arith.constant dense<0.000000e+00> : vector<128x128xf32>
    %6 = tpu.matmul %4, %5, %cst {dimension_numbers = #tpu.dot_dimension_numbers<[1], [0], [0], [1], [0, 0, 1, 1], [], []>} : vector<128x128xbf16>, vector<128x128xbf16>, vector<128x128xf32> -> vector<128x128xf32>
    %7 = arith.addf %3, %6 : vector<128x128xf32>
    %c0_6 = arith.constant 0 : index
    %c0_7 = arith.constant 0 : index
    %8 = vector.load %arg7[%c0_6, %c0_7] : memref<128x128xf32, #tpu.memory_space<vmem>>, vector<128x128xf32>
    tpu.vector_store %arg7[%c0_6, %c0_7], %7 {strides = array<i32>} : memref<128x128xf32, #tpu.memory_space<vmem>>, vector<128x128xf32>,
    %c0_i32_8 = arith.constant 0 : i32
    %9 = arith.cmpi eq, %arg1, %c0_i32_8 : i32
    %10 = arith.extui %9 : i1 to i32
    %c0_i32_9 = arith.constant 0 : i32
    %11 = arith.cmpi ne, %10, %c0_i32_9 : i32
    scf.if %11 {
      %c0_10 = arith.constant 0 : index
      %c0_11 = arith.constant 0 : index
      %12 = vector.load %arg7[%c0_10, %c0_11] : memref<128x128xf32, #tpu.memory_space<vmem>>, vector<128x128xf32>
      %13 = arith.truncf %12 : vector<128x128xf32> to vector<128x128xbf16>
      %c0_12 = arith.constant 0 : index
      %c0_13 = arith.constant 0 : index
      %14 = vector.load %arg4[%c0_12, %c0_13] : memref<128x128xbf16, #tpu.memory_space<vmem>>, vector<128x128xbf16>
      tpu.vector_store %arg4[%c0_12, %c0_13], %13 {strides = array<i32>} : memref<128x128xbf16, #tpu.memory_space<vmem>>, vector<128x128xbf16>,
      %cst_14 = arith.constant dense<0.000000e+00> : vector<128xf32>
      %15 = vector.multi_reduction <add>, %12, %cst_14 [0] : vector<128x128xf32> to vector<128xf32>
      %16 = vector.shape_cast %15 : vector<128xf32> to vector<1x128xf32>
      %17 = arith.mulf %12, %12 : vector<128x128xf32>
      %cst_15 = arith.constant dense<0.000000e+00> : vector<128xf32>
      %18 = vector.multi_reduction <add>, %17, %cst_15 [0] : vector<128x128xf32> to vector<128xf32>
      %19 = vector.shape_cast %18 : vector<128xf32> to vector<1x128xf32>
      %20 = vector.shape_cast %16 : vector<1x128xf32> to vector<1x128xf32>
      %21 = vector.broadcast %20 : vector<1x128xf32> to vector<8x128xf32>
      %c0_16 = arith.constant 0 : index
      %c0_17 = arith.constant 0 : index
      %22 = vector.load %arg5[%c0_16, %c0_17] : memref<8x128xf32, #tpu.memory_space<vmem>>, vector<8x128xf32>
      tpu.vector_store %arg5[%c0_16, %c0_17], %21 {strides = array<i32>} : memref<8x128xf32, #tpu.memory_space<vmem>>, vector<8x128xf32>,
      %23 = vector.shape_cast %19 : vector<1x128xf32> to vector<1x128xf32>
      %24 = vector.broadcast %23 : vector<1x128xf32> to vector<8x128xf32>
      %c0_18 = arith.constant 0 : index
      %c0_19 = arith.constant 0 : index
      %25 = vector.load %arg6[%c0_18, %c0_19] : memref<8x128xf32, #tpu.memory_space<vmem>>, vector<8x128xf32>
      tpu.vector_store %arg6[%c0_18, %c0_19], %24 {strides = array<i32>} : memref<8x128xf32, #tpu.memory_space<vmem>>, vector<8x128xf32>,
    } else {
    }
    return
  }
  func.func @transform_0(%arg0: i32, %arg1: i32) -> (i32, i32) {
    %c0_i32 = arith.constant 0 : i32
    return %arg0, %arg1 : i32, i32
  }
  func.func @transform_1(%arg0: i32, %arg1: i32) -> (i32, i32) {
    %c0_i32 = arith.constant 0 : i32
    %c0_i32_0 = arith.constant 0 : i32
    return %arg1, %c0_i32 : i32, i32
  }
  func.func @transform_2(%arg0: i32, %arg1: i32) -> (i32, i32) {
    %c0_i32 = arith.constant 0 : i32
    %c0_i32_0 = arith.constant 0 : i32
    return %arg0, %c0_i32 : i32, i32
  }
  func.func @transform_3(%arg0: i32, %arg1: i32) -> (i32, i32) {
    %c0_i32 = arith.constant 0 : i32
    %c0_i32_0 = arith.constant 0 : i32
    return %arg0, %c0_i32 : i32, i32
  }
  func.func @transform_4(%arg0: i32, %arg1: i32) -> (i32, i32) {
    %c0_i32 = arith.constant 0 : i32
    %c0_i32_0 = arith.constant 0 : i32
    return %arg0, %c0_i32 : i32, i32
  }
}

module attributes {stable_mosaic.version = 11 : i64} {
  func.func @bn_relu_kernel(%arg0: i32, %arg1: memref<128x128xbf16, #tpu.memory_space<vmem>>, %arg2: memref<1x128xf32, #tpu.memory_space<vmem>>, %arg3: memref<1x128xf32, #tpu.memory_space<vmem>>, %arg4: memref<128x128xbf16, #tpu.memory_space<vmem>>) attributes {dimension_semantics = [#tpu.dimension_semantics<parallel>], iteration_bounds = array<i64: 1>, scalar_prefetch = 0 : i64, scratch_operands = 0 : i64, tpu.core_type = #tpu.core_type<tc>, window_params = [{transform_indices = @transform_0, window_bounds = array<i64: 128, 128>}, {pipeline_mode = #tpu.pipeline_mode<synchronous>, transform_indices = @transform_1, window_bounds = array<i64: 1, 128>}, {pipeline_mode = #tpu.pipeline_mode<synchronous>, transform_indices = @transform_2, window_bounds = array<i64: 1, 128>}, {transform_indices = @transform_3, window_bounds = array<i64: 128, 128>}]} {
    %c0 = arith.constant 0 : index
    %c0_0 = arith.constant 0 : index
    %0 = vector.load %arg1[%c0, %c0_0] : memref<128x128xbf16, #tpu.memory_space<vmem>>, vector<128x128xbf16>
    %1 = arith.extf %0 : vector<128x128xbf16> to vector<128x128xf32>
    %c0_1 = arith.constant 0 : index
    %c0_2 = arith.constant 0 : index
    %2 = vector.load %arg2[%c0_1, %c0_2] : memref<1x128xf32, #tpu.memory_space<vmem>>, vector<1x128xf32>
    %3 = vector.broadcast %2 : vector<1x128xf32> to vector<128x128xf32>
    %4 = arith.mulf %1, %3 : vector<128x128xf32>
    %c0_3 = arith.constant 0 : index
    %c0_4 = arith.constant 0 : index
    %5 = vector.load %arg3[%c0_3, %c0_4] : memref<1x128xf32, #tpu.memory_space<vmem>>, vector<1x128xf32>
    %6 = vector.broadcast %5 : vector<1x128xf32> to vector<128x128xf32>
    %7 = arith.addf %4, %6 : vector<128x128xf32>
    %cst = arith.constant 0.000000e+00 : f32
    %8 = vector.broadcast %cst : f32 to vector<128x128xf32>
    %9 = arith.maximumf %7, %8 : vector<128x128xf32>
    %10 = arith.truncf %9 : vector<128x128xf32> to vector<128x128xbf16>
    %c0_5 = arith.constant 0 : index
    %c0_6 = arith.constant 0 : index
    %11 = vector.load %arg4[%c0_5, %c0_6] : memref<128x128xbf16, #tpu.memory_space<vmem>>, vector<128x128xbf16>
    tpu.vector_store %arg4[%c0_5, %c0_6], %10 {strides = array<i32>} : memref<128x128xbf16, #tpu.memory_space<vmem>>, vector<128x128xbf16>,
    return
  }
  func.func @transform_0(%arg0: i32) -> (i32, i32) {
    %c0_i32 = arith.constant 0 : i32
    %c0_i32_0 = arith.constant 0 : i32
    return %arg0, %c0_i32 : i32, i32
  }
  func.func @transform_1(%arg0: i32) -> (i32, i32) {
    %c0_i32 = arith.constant 0 : i32
    %c0_i32_0 = arith.constant 0 : i32
    %c0_i32_1 = arith.constant 0 : i32
    return %c0_i32, %c0_i32_0 : i32, i32
  }
  func.func @transform_2(%arg0: i32) -> (i32, i32) {
    %c0_i32 = arith.constant 0 : i32
    %c0_i32_0 = arith.constant 0 : i32
    %c0_i32_1 = arith.constant 0 : i32
    return %c0_i32, %c0_i32_0 : i32, i32
  }
  func.func @transform_3(%arg0: i32) -> (i32, i32) {
    %c0_i32 = arith.constant 0 : i32
    %c0_i32_0 = arith.constant 0 : i32
    return %arg0, %c0_i32 : i32, i32
  }
}

</mosaic_0001>

<llo_original>
// kernel: block_forward.2
$region0: #{block_forward.2}
  #allocation0 [shape = 'u32[]', space=smem, size = 0x4, offset = 0x4, fixed_abs, tag = 'smem constant byte address 0x4 - core index']
  #allocation1 [shape = 'u32[144,128]{1,0:T(1,128)}', space=vmem, size = 0x12000, scoped, tag = 'internal scratch']
  #allocation2 [shape = 'f32[128,128]{1,0:T(8,128)}', space=vmem, size = 0x10000, scoped, tag = 'scratch operand']
  %s0 = inlined_call_operand.vmem [shape: bf16[128,128], index: 0, kind: input, shape index: {}]
  %s1 = inlined_call_operand.vmem [shape: bf16[128,128], index: 1, kind: input, shape index: {}]
  %s2 = inlined_call_operand.vmem [shape: bf16[128,128], index: 2, kind: output, shape index: {0}]
  %s3 = inlined_call_operand.vmem [shape: f32[8,128], index: 3, kind: output, shape index: {1}]
  %s4 = inlined_call_operand.vmem [shape: f32[8,128], index: 4, kind: output, shape index: {2}]
  %5 = xla_tuple %s2, %s3, %s4
  %s6 = sld [smem:[#allocation0]]
  $region42: #{block_forward.2} parent=0
    _
  %s8 = ssub.s32 1, %s6
  %s9 = scalar_select 0, %s8, %s6
  // Predicated region
  $region2: #{block_forward.2} parent=0 // pred_check
    _
  $region3: #{block_forward.2} parent=0 // pred_check_branch
    %11 = sbr.rel (0) target = $region5
  $region4: #{block_forward.2} parent=0 // pred_region
    _
  $region5: #{block_forward.2} parent=0 // pred_fallthru
    _
  // Predicated region
  $region6: #{block_forward.2} parent=0 // pred_check
    _
  $region7: #{block_forward.2} parent=0 // pred_check_branch
    %13 = sbr.rel (0) target = $region9
  $region8: #{block_forward.2} parent=0 // pred_region
    _
  $region9: #{block_forward.2} parent=0 // pred_fallthru
    _
  %p15 = scmp.eq.s32.totalorder 0, 0
  // Predicated region
  $region10: #{block_forward.2} parent=0 // pred_check
    %p16 = pneg %p15
  $region11: #{block_forward.2} parent=0 // pred_check_branch
    %18 = sbr.rel (%p16) target = $region13
  $region12: #{block_forward.2} parent=0 // pred_region
    %19 = vst [vmem:[#allocation2] sm:$0xff] 0.0
    %20 = vst [vmem:[#allocation2 + $0x8] sm:$0xff] 0.0
    %21 = vst [vmem:[#allocation2 + $0x10] sm:$0xff] 0.0
    %22 = vst [vmem:[#allocation2 + $0x18] sm:$0xff] 0.0
    %23 = vst [vmem:[#allocation2 + $0x20] sm:$0xff] 0.0
    %24 = vst [vmem:[#allocation2 + $0x28] sm:$0xff] 0.0
    %25 = vst [vmem:[#allocation2 + $0x30] sm:$0xff] 0.0
    %26 = vst [vmem:[#allocation2 + $0x38] sm:$0xff] 0.0
    %27 = vst [vmem:[#allocation2 + $0x40] sm:$0xff] 0.0
    %28 = vst [vmem:[#allocation2 + $0x48] sm:$0xff] 0.0
    %29 = vst [vmem:[#allocation2 + $0x50] sm:$0xff] 0.0
    %30 = vst [vmem:[#allocation2 + $0x58] sm:$0xff] 0.0
    %31 = vst [vmem:[#allocation2 + $0x60] sm:$0xff] 0.0
    %32 = vst [vmem:[#allocation2 + $0x68] sm:$0xff] 0.0
    %33 = vst [vmem:[#allocation2 + $0x70] sm:$0xff] 0.0
    %34 = vst [vmem:[#allocation2 + $0x78] sm:$0xff] 0.0
  $region13: #{block_forward.2} parent=0 // pred_fallthru
    _
  %v35 = vld [vmem:[#allocation2] sm:$0xff]
  %v36 = vld [vmem:[#allocation2 + $0x8] sm:$0xff]
  %v37 = vld [vmem:[#allocation2 + $0x10] sm:$0xff]
  %v38 = vld [vmem:[#allocation2 + $0x18] sm:$0xff]
  %v39 = vld [vmem:[#allocation2 + $0x20] sm:$0xff]
  %v40 = vld [vmem:[#allocation2 + $0x28] sm:$0xff]
  %v41 = vld [vmem:[#allocation2 + $0x30] sm:$0xff]
  %v42 = vld [vmem:[#allocation2 + $0x38] sm:$0xff]
  %v43 = vld [vmem:[#allocation2 + $0x40] sm:$0xff]
  %v44 = vld [vmem:[#allocation2 + $0x48] sm:$0xff]
  %v45 = vld [vmem:[#allocation2 + $0x50] sm:$0xff]
  %v46 = vld [vmem:[#allocation2 + $0x58] sm:$0xff]
  %v47 = vld [vmem:[#allocation2 + $0x60] sm:$0xff]
  %v48 = vld [vmem:[#allocation2 + $0x68] sm:$0xff]
  %v49 = vld [vmem:[#allocation2 + $0x70] sm:$0xff]
  %v50 = vld [vmem:[#allocation2 + $0x78] sm:$0xff]
  %v51 = vld [vmem:[%s0] sm:$0xf]
  %v52 = vld [vmem:[%s0 + $0x4] sm:$0xf]
  %v53 = vld [vmem:[%s0 + $0x8] sm:$0xf]
  %v54 = vld [vmem:[%s0 + $0xc] sm:$0xf]
  %v55 = vld [vmem:[%s0 + $0x10] sm:$0xf]
  %v56 = vld [vmem:[%s0 + $0x14] sm:$0xf]
  %v57 = vld [vmem:[%s0 + $0x18] sm:$0xf]
  %v58 = vld [vmem:[%s0 + $0x1c] sm:$0xf]
  %v59 = vld [vmem:[%s0 + $0x20] sm:$0xf]
  %v60 = vld [vmem:[%s0 + $0x24] sm:$0xf]
  %v61 = vld [vmem:[%s0 + $0x28] sm:$0xf]
  %v62 = vld [vmem:[%s0 + $0x2c] sm:$0xf]
  %v63 = vld [vmem:[%s0 + $0x30] sm:$0xf]
  %v64 = vld [vmem:[%s0 + $0x34] sm:$0xf]
  %v65 = vld [vmem:[%s0 + $0x38] sm:$0xf]
  %v66 = vld [vmem:[%s0 + $0x3c] sm:$0xf]
  %v67 = vld [vmem:[%s1] sm:$0xf]
  %v68 = vld [vmem:[%s1 + $0x4] sm:$0xf]
  %v69 = vld [vmem:[%s1 + $0x8] sm:$0xf]
  %v70 = vld [vmem:[%s1 + $0xc] sm:$0xf]
  %v71 = vld [vmem:[%s1 + $0x10] sm:$0xf]
  %v72 = vld [vmem:[%s1 + $0x14] sm:$0xf]
  %v73 = vld [vmem:[%s1 + $0x18] sm:$0xf]
  %v74 = vld [vmem:[%s1 + $0x1c] sm:$0xf]
  %v75 = vld [vmem:[%s1 + $0x20] sm:$0xf]
  %v76 = vld [vmem:[%s1 + $0x24] sm:$0xf]
  %v77 = vld [vmem:[%s1 + $0x28] sm:$0xf]
  %v78 = vld [vmem:[%s1 + $0x2c] sm:$0xf]
  %v79 = vld [vmem:[%s1 + $0x30] sm:$0xf]
  %v80 = vld [vmem:[%s1 + $0x34] sm:$0xf]
  %v81 = vld [vmem:[%s1 + $0x38] sm:$0xf]
  %v82 = vld [vmem:[%s1 + $0x3c] sm:$0xf]
  %v99 = vunpack.c.l.b16 %v51
  %v100 = vunpack.c.l.b16 %v52
  %v101 = vunpack.c.l.b16 %v53
  %v102 = vunpack.c.l.b16 %v54
  %v103 = vunpack.c.l.b16 %v55
  %v104 = vunpack.c.l.b16 %v56
  %v105 = vunpack.c.l.b16 %v57
  %v106 = vunpack.c.l.b16 %v58
  %v107 = vunpack.c.l.b16 %v59
  %v108 = vunpack.c.l.b16 %v60
  %v109 = vunpack.c.l.b16 %v61
  %v110 = vunpack.c.l.b16 %v62
  %v111 = vunpack.c.l.b16 %v63
  %v112 = vunpack.c.l.b16 %v64
  %v113 = vunpack.c.l.b16 %v65
  %v114 = vunpack.c.l.b16 %v66
  %v115 = vpack.c.b16 %v100, %v99
  %v116 = vpack.c.b16 %v102, %v101
  %v117 = vpack.c.b16 %v104, %v103
  %v118 = vpack.c.b16 %v106, %v105
  %v119 = vpack.c.b16 %v108, %v107
  %v120 = vpack.c.b16 %v110, %v109
  %v121 = vpack.c.b16 %v112, %v111
  %v122 = vpack.c.b16 %v114, %v113
  %v147 = vunpack.c.l.b16 %v67
  %v148 = vunpack.c.l.b16 %v68
  %v149 = vunpack.c.l.b16 %v69
  %v150 = vunpack.c.l.b16 %v70
  %v151 = vunpack.c.l.b16 %v71
  %v152 = vunpack.c.l.b16 %v72
  %v153 = vunpack.c.l.b16 %v73
  %v154 = vunpack.c.l.b16 %v74
  %v155 = vunpack.c.l.b16 %v75
  %v156 = vunpack.c.l.b16 %v76
  %v157 = vunpack.c.l.b16 %v77
  %v158 = vunpack.c.l.b16 %v78
  %v159 = vunpack.c.l.b16 %v79
  %v160 = vunpack.c.l.b16 %v80
  %v161 = vunpack.c.l.b16 %v81
  %v162 = vunpack.c.l.b16 %v82
  %v163 = vpack.c.b16 %v148, %v147
  %v164 = vpack.c.b16 %v150, %v149
  %v165 = vpack.c.b16 %v152, %v151
  %v166 = vpack.c.b16 %v154, %v153
  %v167 = vpack.c.b16 %v156, %v155
  %v168 = vpack.c.b16 %v158, %v157
  %v169 = vpack.c.b16 %v160, %v159
  %v170 = vpack.c.b16 %v162, %v161
  %179 = vmatprep.subr.bf16.mxu0 0
  %180 = vmatpush1.bf16.msra.mxu0 %v163
  %181 = vmatprep.subr.bf16.mxu0 0
  %182 = vmatpush1.bf16.msra.mxu0 %v164
  %183 = vmatprep.subr.bf16.mxu0 0
  %184 = vmatpush1.bf16.msra.mxu0 %v165
  %185 = vmatprep.subr.bf16.mxu0 0
  %186 = vmatpush1.bf16.msra.mxu0 %v166
  %187 = vmatprep.subr.bf16.mxu0 0
  %188 = vmatpush1.bf16.msra.mxu0 %v167
  %189 = vmatprep.subr.bf16.mxu0 0
  %190 = vmatpush1.bf16.msra.mxu0 %v168
  %191 = vmatprep.subr.bf16.mxu0 0
  %192 = vmatpush1.bf16.msra.mxu0 %v169
  %193 = vmatprep.subr.bf16.mxu0 0
  %194 = vmatpush1.bf16.msra.mxu0 %v170
  %195 = vmatprep.subr.bf16.mxu0 0
  %196 = vmatpush1.bf16.msra.mxu0 0
  %197 = vmatprep.subr.bf16.mxu0 0
  %198 = vmatpush1.bf16.msra.mxu0 0
  %199 = vmatprep.subr.bf16.mxu0 0
  %200 = vmatpush1.bf16.msra.mxu0 0
  %201 = vmatprep.subr.bf16.mxu0 0
  %202 = vmatpush1.bf16.msra.mxu0 0
  %203 = vmatprep.subr.bf16.mxu0 0
  %204 = vmatpush1.bf16.msra.mxu0 0
  %205 = vmatprep.subr.bf16.mxu0 0
  %206 = vmatpush1.bf16.msra.mxu0 0
  %207 = vmatprep.subr.bf16.mxu0 0
  %208 = vmatpush1.bf16.msra.mxu0 0
  %209 = vmatprep.subr.bf16.mxu0 0
  %210 = vmatpush1.bf16.msra.mxu0 0
  %211 = vmatprep.mubr.bf16.mxu0 0
  %212 = vmatmul.mubr.bf16.gmra.mrb[0].mxu0 %v115
  %v213 = vpop.f32.mrb[0].mxu0
  %v214 = vadd.f32 0.0, %v213
  %v215 = vpop.f32.mrb[0].mxu0
  %v216 = vpop.f32.mrb[0].mxu0
  %v217 = vadd.f32 0.0, %v216
  %v218 = vpop.f32.mrb[0].mxu0
  %219 = vmatprep.mubr.bf16.mxu0 0
  %220 = vmatmul.mubr.bf16.gmra.mrb[0].mxu0 %v116
  %v221 = vpop.f32.mrb[0].mxu0
  %v222 = vadd.f32 0.0, %v221
  %v223 = vpop.f32.mrb[0].mxu0
  %v224 = vpop.f32.mrb[0].mxu0
  %v225 = vadd.f32 0.0, %v224
  %v226 = vpop.f32.mrb[0].mxu0
  %227 = vmatprep.mubr.bf16.mxu0 0
  %228 = vmatmul.mubr.bf16.gmra.mrb[0].mxu0 %v117
  %v229 = vpop.f32.mrb[0].mxu0
  %v230 = vadd.f32 0.0, %v229
  %v231 = vpop.f32.mrb[0].mxu0
  %v232 = vpop.f32.mrb[0].mxu0
  %v233 = vadd.f32 0.0, %v232
  %v234 = vpop.f32.mrb[0].mxu0
  %235 = vmatprep.mubr.bf16.mxu0 0
  %236 = vmatmul.mubr.bf16.gmra.mrb[0].mxu0 %v118
  %v237 = vpop.f32.mrb[0].mxu0
  %v238 = vadd.f32 0.0, %v237
  %v239 = vpop.f32.mrb[0].mxu0
  %v240 = vpop.f32.mrb[0].mxu0
  %v241 = vadd.f32 0.0, %v240
  %v242 = vpop.f32.mrb[0].mxu0
  %243 = vmatprep.mubr.bf16.mxu0 0
  %244 = vmatmul.mubr.bf16.gmra.mrb[0].mxu0 %v119
  %v245 = vpop.f32.mrb[0].mxu0
  %v246 = vadd.f32 0.0, %v245
  %v247 = vpop.f32.mrb[0].mxu0
  %v248 = vpop.f32.mrb[0].mxu0
  %v249 = vadd.f32 0.0, %v248
  %v250 = vpop.f32.mrb[0].mxu0
  %251 = vmatprep.mubr.bf16.mxu0 0
  %252 = vmatmul.mubr.bf16.gmra.mrb[0].mxu0 %v120
  %v253 = vpop.f32.mrb[0].mxu0
  %v254 = vadd.f32 0.0, %v253
  %v255 = vpop.f32.mrb[0].mxu0
  %v256 = vpop.f32.mrb[0].mxu0
  %v257 = vadd.f32 0.0, %v256
  %v258 = vpop.f32.mrb[0].mxu0
  %259 = vmatprep.mubr.bf16.mxu0 0
  %260 = vmatmul.mubr.bf16.gmra.mrb[0].mxu0 %v121
  %v261 = vpop.f32.mrb[0].mxu0
  %v262 = vadd.f32 0.0, %v261
  %v263 = vpop.f32.mrb[0].mxu0
  %v264 = vpop.f32.mrb[0].mxu0
  %v265 = vadd.f32 0.0, %v264
  %v266 = vpop.f32.mrb[0].mxu0
  %267 = vmatprep.mubr.bf16.mxu0 0
  %268 = vmatmul.mubr.bf16.gmra.mrb[0].mxu0 %v122
  %v269 = vpop.f32.mrb[0].mxu0
  %v270 = vadd.f32 0.0, %v269
  %v271 = vpop.f32.mrb[0].mxu0
  %v272 = vpop.f32.mrb[0].mxu0
  %v273 = vadd.f32 0.0, %v272
  %v274 = vpop.f32.mrb[0].mxu0
  %275 = vdwg.mxu0
  %v276 = vadd.f32 %v35, %v214
  %v277 = vadd.f32 %v36, %v217
  %v278 = vadd.f32 %v37, %v222
  %v279 = vadd.f32 %v38, %v225
  %v280 = vadd.f32 %v39, %v230
  %v281 = vadd.f32 %v40, %v233
  %v282 = vadd.f32 %v41, %v238
  %v283 = vadd.f32 %v42, %v241
  %v284 = vadd.f32 %v43, %v246
  %v285 = vadd.f32 %v44, %v249
  %v286 = vadd.f32 %v45, %v254
  %v287 = vadd.f32 %v46, %v257
  %v288 = vadd.f32 %v47, %v262
  %v289 = vadd.f32 %v48, %v265
  %v290 = vadd.f32 %v49, %v270
  %v291 = vadd.f32 %v50, %v273
  %292 = vst [vmem:[#allocation2] sm:$0xff] %v276
  %293 = vst [vmem:[#allocation2 + $0x8] sm:$0xff] %v277
  %294 = vst [vmem:[#allocation2 + $0x10] sm:$0xff] %v278
  %295 = vst [vmem:[#allocation2 + $0x18] sm:$0xff] %v279
  %296 = vst [vmem:[#allocation2 + $0x20] sm:$0xff] %v280
  %297 = vst [vmem:[#allocation2 + $0x28] sm:$0xff] %v281
  %298 = vst [vmem:[#allocation2 + $0x30] sm:$0xff] %v282
  %299 = vst [vmem:[#allocation2 + $0x38] sm:$0xff] %v283
  %300 = vst [vmem:[#allocation2 + $0x40] sm:$0xff] %v284
  %301 = vst [vmem:[#allocation2 + $0x48] sm:$0xff] %v285
  %302 = vst [vmem:[#allocation2 + $0x50] sm:$0xff] %v286
  %303 = vst [vmem:[#allocation2 + $0x58] sm:$0xff] %v287
  %304 = vst [vmem:[#allocation2 + $0x60] sm:$0xff] %v288
  %305 = vst [vmem:[#allocation2 + $0x68] sm:$0xff] %v289
  %306 = vst [vmem:[#allocation2 + $0x70] sm:$0xff] %v290
  %307 = vst [vmem:[#allocation2 + $0x78] sm:$0xff] %v291
  // Predicated region
  $region14: #{block_forward.2} parent=0 // pred_check
    %p308 = pneg %p15
  $region15: #{block_forward.2} parent=0 // pred_check_branch
    %310 = sbr.rel (%p308) target = $region17
  $region16: #{block_forward.2} parent=0 // pred_region
    %v311 = vld [vmem:[#allocation2] sm:$0xff]
    %v312 = vld [vmem:[#allocation2 + $0x8] sm:$0xff]
    %v313 = vld [vmem:[#allocation2 + $0x10] sm:$0xff]
    %v314 = vld [vmem:[#allocation2 + $0x18] sm:$0xff]
    %v315 = vld [vmem:[#allocation2 + $0x20] sm:$0xff]
    %v316 = vld [vmem:[#allocation2 + $0x28] sm:$0xff]
    %v317 = vld [vmem:[#allocation2 + $0x30] sm:$0xff]
    %v318 = vld [vmem:[#allocation2 + $0x38] sm:$0xff]
    %v319 = vld [vmem:[#allocation2 + $0x40] sm:$0xff]
    %v320 = vld [vmem:[#allocation2 + $0x48] sm:$0xff]
    %v321 = vld [vmem:[#allocation2 + $0x50] sm:$0xff]
    %v322 = vld [vmem:[#allocation2 + $0x58] sm:$0xff]
    %v323 = vld [vmem:[#allocation2 + $0x60] sm:$0xff]
    %v324 = vld [vmem:[#allocation2 + $0x68] sm:$0xff]
    %v325 = vld [vmem:[#allocation2 + $0x70] sm:$0xff]
    %v326 = vld [vmem:[#allocation2 + $0x78] sm:$0xff]
    %v327 = vpack.c.bf16 %v312, %v311
    %v328 = vpack.c.bf16 %v314, %v313
    %v329 = vpack.c.bf16 %v316, %v315
    %v330 = vpack.c.bf16 %v318, %v317
    %v331 = vpack.c.bf16 %v320, %v319
    %v332 = vpack.c.bf16 %v322, %v321
    %v333 = vpack.c.bf16 %v324, %v323
    %v334 = vpack.c.bf16 %v326, %v325
    %v343 = vunpack.c.l.b16 %v327
    %v344 = vunpack.c.h.b16 %v327
    %v345 = vunpack.c.l.b16 %v328
    %v346 = vunpack.c.h.b16 %v328
    %v347 = vunpack.c.l.b16 %v329
    %v348 = vunpack.c.h.b16 %v329
    %v349 = vunpack.c.l.b16 %v330
    %v350 = vunpack.c.h.b16 %v330
    %v351 = vunpack.c.l.b16 %v331
    %v352 = vunpack.c.h.b16 %v331
    %v353 = vunpack.c.l.b16 %v332
    %v354 = vunpack.c.h.b16 %v332
    %v355 = vunpack.c.l.b16 %v333
    %v356 = vunpack.c.h.b16 %v333
    %v357 = vunpack.c.l.b16 %v334
    %v358 = vunpack.c.h.b16 %v334
    %v359 = vpack.c.b16 %v343, %v343
    %v360 = vpack.c.b16 %v344, %v344
    %v361 = vpack.c.b16 %v345, %v345
    %v362 = vpack.c.b16 %v346, %v346
    %v363 = vpack.c.b16 %v347, %v347
    %v364 = vpack.c.b16 %v348, %v348
    %v365 = vpack.c.b16 %v349, %v349
    %v366 = vpack.c.b16 %v350, %v350
    %v367 = vpack.c.b16 %v351, %v351
    %v368 = vpack.c.b16 %v352, %v352
    %v369 = vpack.c.b16 %v353, %v353
    %v370 = vpack.c.b16 %v354, %v354
    %v371 = vpack.c.b16 %v355, %v355
    %v372 = vpack.c.b16 %v356, %v356
    %v373 = vpack.c.b16 %v357, %v357
    %v374 = vpack.c.b16 %v358, %v358
    %391 = vst [vmem:[%s2] sm:$0xf] %v359
    %392 = vst [vmem:[%s2 + $0x4] sm:$0xf] %v360
    %393 = vst [vmem:[%s2 + $0x8] sm:$0xf] %v361
    %394 = vst [vmem:[%s2 + $0xc] sm:$0xf] %v362
    %395 = vst [vmem:[%s2 + $0x10] sm:$0xf] %v363
    %396 = vst [vmem:[%s2 + $0x14] sm:$0xf] %v364
    %397 = vst [vmem:[%s2 + $0x18] sm:$0xf] %v365
    %398 = vst [vmem:[%s2 + $0x1c] sm:$0xf] %v366
    %399 = vst [vmem:[%s2 + $0x20] sm:$0xf] %v367
    %400 = vst [vmem:[%s2 + $0x24] sm:$0xf] %v368
    %401 = vst [vmem:[%s2 + $0x28] sm:$0xf] %v369
    %402 = vst [vmem:[%s2 + $0x2c] sm:$0xf] %v370
    %403 = vst [vmem:[%s2 + $0x30] sm:$0xf] %v371
    %404 = vst [vmem:[%s2 + $0x34] sm:$0xf] %v372
    %405 = vst [vmem:[%s2 + $0x38] sm:$0xf] %v373
    %406 = vst [vmem:[%s2 + $0x3c] sm:$0xf] %v374
    %v407 = vadd.f32 %v311, %v312
    %v408 = vadd.f32 %v407, %v313
    %v409 = vadd.f32 %v408, %v314
    %v410 = vadd.f32 %v409, %v315
    %v411 = vadd.f32 %v410, %v316
    %v412 = vadd.f32 %v411, %v317
    %v413 = vadd.f32 %v412, %v318
    %v414 = vadd.f32 %v413, %v319
    %v415 = vadd.f32 %v414, %v320
    %v416 = vadd.f32 %v415, %v321
    %v417 = vadd.f32 %v416, %v322
    %v418 = vadd.f32 %v417, %v323
    %v419 = vadd.f32 %v418, %v324
    %v420 = vadd.f32 %v419, %v325
    %v421 = vadd.f32 %v420, %v326
    %v422 = vrot.slane %v421, 4
    %v423 = vadd.f32 %v421, %v422
    %v424 = vrot.slane %v423, 2
    %v425 = vadd.f32 %v423, %v424
    %v426 = vrot.slane %v425, 1
    %v427 = vadd.f32 %v425, %v426
    %v428 = vmul.f32 %v311, %v311
    %v429 = vmul.f32 %v312, %v312
    %v430 = vmul.f32 %v313, %v313
    %v431 = vmul.f32 %v314, %v314
    %v432 = vmul.f32 %v315, %v315
    %v433 = vmul.f32 %v316, %v316
    %v434 = vmul.f32 %v317, %v317
    %v435 = vmul.f32 %v318, %v318
    %v436 = vmul.f32 %v319, %v319
    %v437 = vmul.f32 %v320, %v320
    %v438 = vmul.f32 %v321, %v321
    %v439 = vmul.f32 %v322, %v322
    %v440 = vmul.f32 %v323, %v323
    %v441 = vmul.f32 %v324, %v324
    %v442 = vmul.f32 %v325, %v325
    %v443 = vmul.f32 %v326, %v326
    %v444 = vadd.f32 %v428, %v429
    %v445 = vadd.f32 %v444, %v430
    %v446 = vadd.f32 %v445, %v431
    %v447 = vadd.f32 %v446, %v432
    %v448 = vadd.f32 %v447, %v433
    %v449 = vadd.f32 %v448, %v434
    %v450 = vadd.f32 %v449, %v435
    %v451 = vadd.f32 %v450, %v436
    %v452 = vadd.f32 %v451, %v437
    %v453 = vadd.f32 %v452, %v438
    %v454 = vadd.f32 %v453, %v439
    %v455 = vadd.f32 %v454, %v440
    %v456 = vadd.f32 %v455, %v441
    %v457 = vadd.f32 %v456, %v442
    %v458 = vadd.f32 %v457, %v443
    %v459 = vrot.slane %v458, 4
    %v460 = vadd.f32 %v458, %v459
    %v461 = vrot.slane %v460, 2
    %v462 = vadd.f32 %v460, %v461
    %v463 = vrot.slane %v462, 1
    %v464 = vadd.f32 %v462, %v463
    %465 = vst [vmem:[%s3] sm:$0xff] %v427
    %466 = vst [vmem:[%s4] sm:$0xff] %v464
  $region17: #{block_forward.2} parent=0 // pred_fallthru
    _
  // Predicated region
  $region18: #{block_forward.2} parent=0 // pred_check
    _
  $region19: #{block_forward.2} parent=0 // pred_check_branch
    %468 = sbr.rel (0) target = $region21
  $region20: #{block_forward.2} parent=0 // pred_region
    _
  $region21: #{block_forward.2} parent=0 // pred_fallthru
    _
  // Predicated region
  $region22: #{block_forward.2} parent=0 // pred_check
    _
  $region23: #{block_forward.2} parent=0 // pred_check_branch
    %470 = sbr.rel (0) target = $region25
  $region24: #{block_forward.2} parent=0 // pred_region
    _
  $region25: #{block_forward.2} parent=0 // pred_fallthru
    _
  // Predicated region
  $region26: #{block_forward.2} parent=0 // pred_check
    _
  $region27: #{block_forward.2} parent=0 // pred_check_branch
    %472 = sbr.rel (0) target = $region29
  $region28: #{block_forward.2} parent=0 // pred_region
    _
  $region29: #{block_forward.2} parent=0 // pred_fallthru
    _
  // Predicated region
  $region30: #{block_forward.2} parent=0 // pred_check
    _
  $region31: #{block_forward.2} parent=0 // pred_check_branch
    %474 = sbr.rel (0) target = $region33
  $region32: #{block_forward.2} parent=0 // pred_region
    _
  $region33: #{block_forward.2} parent=0 // pred_fallthru
    _
  // Predicated region
  $region34: #{block_forward.2} parent=0 // pred_check
    _
  $region35: #{block_forward.2} parent=0 // pred_check_branch
    %476 = sbr.rel (0) target = $region37
  $region36: #{block_forward.2} parent=0 // pred_region
    _
  $region37: #{block_forward.2} parent=0 // pred_fallthru
    _
  // Predicated region
  $region38: #{block_forward.2} parent=0 // pred_check
    _
  $region39: #{block_forward.2} parent=0 // pred_check_branch
    %478 = sbr.rel (0) target = $region41
  $region40: #{block_forward.2} parent=0 // pred_region
    _
  $region41: #{block_forward.2} parent=0 // pred_fallthru
    _

// kernel: block_forward.3
$region0: #{block_forward.3}
  #allocation0 [shape = 'u32[]', space=smem, size = 0x4, offset = 0x4, fixed_abs, tag = 'smem constant byte address 0x4 - core index']
  #allocation1 [shape = 'u32[144,128]{1,0:T(1,128)}', space=vmem, size = 0x12000, scoped, tag = 'internal scratch']
  %s0 = inlined_call_operand.vmem [shape: bf16[128,128], index: 0, kind: input, shape index: {}, may-alias: {0,3}]
  %s1 = inlined_call_operand.vmem [shape: f32[1,128], index: 1, kind: input, shape index: {}]
  %s2 = inlined_call_operand.vmem [shape: f32[1,128], index: 2, kind: input, shape index: {}]
  %s3 = inlined_call_operand.vmem [shape: bf16[128,128], index: 3, kind: output, shape index: {}, may-alias: {0,3}]
  %s4 = sld [smem:[#allocation0]]
  $region22: #{block_forward.3} parent=0
    _
  %s6 = ssub.s32 1, %s4
  %s7 = scalar_select 0, %s6, %s4
  // Predicated region
  $region2: #{block_forward.3} parent=0 // pred_check
    _
  $region3: #{block_forward.3} parent=0 // pred_check_branch
    %9 = sbr.rel (0) target = $region5
  $region4: #{block_forward.3} parent=0 // pred_region
    _
  $region5: #{block_forward.3} parent=0 // pred_fallthru
    _
  // Predicated region
  $region6: #{block_forward.3} parent=0 // pred_check
    _
  $region7: #{block_forward.3} parent=0 // pred_check_branch
    %11 = sbr.rel (0) target = $region9
  $region8: #{block_forward.3} parent=0 // pred_region
    _
  $region9: #{block_forward.3} parent=0 // pred_fallthru
    _
  // Predicated region
  $region10: #{block_forward.3} parent=0 // pred_check
    _
  $region11: #{block_forward.3} parent=0 // pred_check_branch
    %13 = sbr.rel (0) target = $region13
  $region12: #{block_forward.3} parent=0 // pred_region
    _
  $region13: #{block_forward.3} parent=0 // pred_fallthru
    _
  %v14 = vld [vmem:[%s0] sm:$0xf]
  %v15 = vld [vmem:[%s0 + $0x4] sm:$0xf]
  %v16 = vld [vmem:[%s0 + $0x8] sm:$0xf]
  %v17 = vld [vmem:[%s0 + $0xc] sm:$0xf]
  %v18 = vld [vmem:[%s0 + $0x10] sm:$0xf]
  %v19 = vld [vmem:[%s0 + $0x14] sm:$0xf]
  %v20 = vld [vmem:[%s0 + $0x18] sm:$0xf]
  %v21 = vld [vmem:[%s0 + $0x1c] sm:$0xf]
  %v22 = vld [vmem:[%s0 + $0x20] sm:$0xf]
  %v23 = vld [vmem:[%s0 + $0x24] sm:$0xf]
  %v24 = vld [vmem:[%s0 + $0x28] sm:$0xf]
  %v25 = vld [vmem:[%s0 + $0x2c] sm:$0xf]
  %v26 = vld [vmem:[%s0 + $0x30] sm:$0xf]
  %v27 = vld [vmem:[%s0 + $0x34] sm:$0xf]
  %v28 = vld [vmem:[%s0 + $0x38] sm:$0xf]
  %v29 = vld [vmem:[%s0 + $0x3c] sm:$0xf]
  %v30 = vunpack.c.l.bf16 %v14
  %v31 = vunpack.c.l.bf16 %v15
  %v32 = vunpack.c.l.bf16 %v16
  %v33 = vunpack.c.l.bf16 %v17
  %v34 = vunpack.c.l.bf16 %v18
  %v35 = vunpack.c.l.bf16 %v19
  %v36 = vunpack.c.l.bf16 %v20
  %v37 = vunpack.c.l.bf16 %v21
  %v38 = vunpack.c.l.bf16 %v22
  %v39 = vunpack.c.l.bf16 %v23
  %v40 = vunpack.c.l.bf16 %v24
  %v41 = vunpack.c.l.bf16 %v25
  %v42 = vunpack.c.l.bf16 %v26
  %v43 = vunpack.c.l.bf16 %v27
  %v44 = vunpack.c.l.bf16 %v28
  %v45 = vunpack.c.l.bf16 %v29
  %v46 = vld [vmem:[%s1] sm:$0x1]
  %v48 = vlaneseq
  %v49 = vshrl.u32 %v48, 7
  %v50 = vsub.s32 0, %v49
  %v51 = vrot.slane %v46, %v50
  %v53 = vmul.f32 %v30, %v51
  %v54 = vmul.f32 %v31, %v51
  %v55 = vmul.f32 %v32, %v51
  %v56 = vmul.f32 %v33, %v51
  %v57 = vmul.f32 %v34, %v51
  %v58 = vmul.f32 %v35, %v51
  %v59 = vmul.f32 %v36, %v51
  %v60 = vmul.f32 %v37, %v51
  %v61 = vmul.f32 %v38, %v51
  %v62 = vmul.f32 %v39, %v51
  %v63 = vmul.f32 %v40, %v51
  %v64 = vmul.f32 %v41, %v51
  %v65 = vmul.f32 %v42, %v51
  %v66 = vmul.f32 %v43, %v51
  %v67 = vmul.f32 %v44, %v51
  %v68 = vmul.f32 %v45, %v51
  %v69 = vld [vmem:[%s2] sm:$0x1]
  %v71 = vlaneseq
  %v72 = vshrl.u32 %v71, 7
  %v73 = vsub.s32 0, %v72
  %v74 = vrot.slane %v69, %v73
  %v76 = vadd.f32 %v53, %v74
  %v77 = vadd.f32 %v54, %v74
  %v78 = vadd.f32 %v55, %v74
  %v79 = vadd.f32 %v56, %v74
  %v80 = vadd.f32 %v57, %v74
  %v81 = vadd.f32 %v58, %v74
  %v82 = vadd.f32 %v59, %v74
  %v83 = vadd.f32 %v60, %v74
  %v84 = vadd.f32 %v61, %v74
  %v85 = vadd.f32 %v62, %v74
  %v86 = vadd.f32 %v63, %v74
  %v87 = vadd.f32 %v64, %v74
  %v88 = vadd.f32 %v65, %v74
  %v89 = vadd.f32 %v66, %v74
  %v90 = vadd.f32 %v67, %v74
  %v91 = vadd.f32 %v68, %v74
  %v92 = vmax.f32 %v76, 0.0
  %v93 = vmax.f32 %v77, 0.0
  %v94 = vmax.f32 %v78, 0.0
  %v95 = vmax.f32 %v79, 0.0
  %v96 = vmax.f32 %v80, 0.0
  %v97 = vmax.f32 %v81, 0.0
  %v98 = vmax.f32 %v82, 0.0
  %v99 = vmax.f32 %v83, 0.0
  %v100 = vmax.f32 %v84, 0.0
  %v101 = vmax.f32 %v85, 0.0
  %v102 = vmax.f32 %v86, 0.0
  %v103 = vmax.f32 %v87, 0.0
  %v104 = vmax.f32 %v88, 0.0
  %v105 = vmax.f32 %v89, 0.0
  %v106 = vmax.f32 %v90, 0.0
  %v107 = vmax.f32 %v91, 0.0
  %v108 = vpack.c.bf16 %v93, %v92
  %v109 = vpack.c.bf16 %v95, %v94
  %v110 = vpack.c.bf16 %v97, %v96
  %v111 = vpack.c.bf16 %v99, %v98
  %v112 = vpack.c.bf16 %v101, %v100
  %v113 = vpack.c.bf16 %v103, %v102
  %v114 = vpack.c.bf16 %v105, %v104
  %v115 = vpack.c.bf16 %v107, %v106
  %v124 = vunpack.c.l.b16 %v108
  %v125 = vunpack.c.h.b16 %v108
  %v126 = vunpack.c.l.b16 %v109
  %v127 = vunpack.c.h.b16 %v109
  %v128 = vunpack.c.l.b16 %v110
  %v129 = vunpack.c.h.b16 %v110
  %v130 = vunpack.c.l.b16 %v111
  %v131 = vunpack.c.h.b16 %v111
  %v132 = vunpack.c.l.b16 %v112
  %v133 = vunpack.c.h.b16 %v112
  %v134 = vunpack.c.l.b16 %v113
  %v135 = vunpack.c.h.b16 %v113
  %v136 = vunpack.c.l.b16 %v114
  %v137 = vunpack.c.h.b16 %v114
  %v138 = vunpack.c.l.b16 %v115
  %v139 = vunpack.c.h.b16 %v115
  %v140 = vpack.c.b16 %v124, %v124
  %v141 = vpack.c.b16 %v125, %v125
  %v142 = vpack.c.b16 %v126, %v126
  %v143 = vpack.c.b16 %v127, %v127
  %v144 = vpack.c.b16 %v128, %v128
  %v145 = vpack.c.b16 %v129, %v129
  %v146 = vpack.c.b16 %v130, %v130
  %v147 = vpack.c.b16 %v131, %v131
  %v148 = vpack.c.b16 %v132, %v132
  %v149 = vpack.c.b16 %v133, %v133
  %v150 = vpack.c.b16 %v134, %v134
  %v151 = vpack.c.b16 %v135, %v135
  %v152 = vpack.c.b16 %v136, %v136
  %v153 = vpack.c.b16 %v137, %v137
  %v154 = vpack.c.b16 %v138, %v138
  %v155 = vpack.c.b16 %v139, %v139
  %172 = vst [vmem:[%s3] sm:$0xf] %v140
  %173 = vst [vmem:[%s3 + $0x4] sm:$0xf] %v141
  %174 = vst [vmem:[%s3 + $0x8] sm:$0xf] %v142
  %175 = vst [vmem:[%s3 + $0xc] sm:$0xf] %v143
  %176 = vst [vmem:[%s3 + $0x10] sm:$0xf] %v144
  %177 = vst [vmem:[%s3 + $0x14] sm:$0xf] %v145
  %178 = vst [vmem:[%s3 + $0x18] sm:$0xf] %v146
  %179 = vst [vmem:[%s3 + $0x1c] sm:$0xf] %v147
  %180 = vst [vmem:[%s3 + $0x20] sm:$0xf] %v148
  %181 = vst [vmem:[%s3 + $0x24] sm:$0xf] %v149
  %182 = vst [vmem:[%s3 + $0x28] sm:$0xf] %v150
  %183 = vst [vmem:[%s3 + $0x2c] sm:$0xf] %v151
  %184 = vst [vmem:[%s3 + $0x30] sm:$0xf] %v152
  %185 = vst [vmem:[%s3 + $0x34] sm:$0xf] %v153
  %186 = vst [vmem:[%s3 + $0x38] sm:$0xf] %v154
  %187 = vst [vmem:[%s3 + $0x3c] sm:$0xf] %v155
  // Predicated region
  $region14: #{block_forward.3} parent=0 // pred_check
    _
  $region15: #{block_forward.3} parent=0 // pred_check_branch
    %189 = sbr.rel (0) target = $region17
  $region16: #{block_forward.3} parent=0 // pred_region
    _
  $region17: #{block_forward.3} parent=0 // pred_fallthru
    _
  // Predicated region
  $region18: #{block_forward.3} parent=0 // pred_check
    _
  $region19: #{block_forward.3} parent=0 // pred_check_branch
    %191 = sbr.rel (0) target = $region21
  $region20: #{block_forward.3} parent=0 // pred_region
    _
  $region21: #{block_forward.3} parent=0 // pred_fallthru
    _

</llo_original>
